<compile_context>
chip_gen: v5e
topology: v5e:2x2
jax: 0.10.0
libtpu: 0.0.40
codegen_flags: <defaults>
</compile_context>

<pallas_src>
import functools

import jax
import jax.numpy as jnp
from jax.experimental import pallas as pl
from jax.experimental.pallas import tpu as pltpu


def video_classifier_kernel(patches_ref, w_emb_ref, b_emb_ref, w_cls_ref,
                            b_cls_ref, out_ref, sum_acc, max_acc,
                            *, num_patches):
    # patches_ref: (B, TP, K)   bf16   one patch tile, all batch rows
    # w_emb_ref:   (K, Fp)      bf16   patch-embed weight (lane-padded)
    # b_emb_ref:   (1, Fp)      f32    patch-embed bias
    # w_cls_ref:   (2*Fp, NCp)  bf16   fc_cls weight^T, [mean half; max half]
    # b_cls_ref:   (1, NCp)     f32    fc_cls bias
    # out_ref:     (B, NCp)     f32    logits (lane-dense, written at finalize)
    # sum_acc/max_acc: (B, Fp)  f32    running pooling accumulators (scratch)
    p = pl.program_id(0)
    b_sz, tp, k = patches_ref.shape
    fp = w_emb_ref.shape[1]

    @pl.when(p == 0)
    def _init():
        sum_acc[...] = jnp.zeros_like(sum_acc)
        max_acc[...] = jnp.full_like(max_acc, -jnp.inf)

    # ---- synthetic vision backbone: patch embed (MXU, bf16 in / f32 acc) ----
    # Tile-aligned merge of (B, TP, K) -> (B*TP, K): tp % 16 == 0 keeps the
    # bf16 sublane packing intact, so this is a relabeling, not a relayout.
    x2 = patches_ref[...].reshape(b_sz * tp, k)
    emb = jnp.dot(x2, w_emb_ref[...],
                  preferred_element_type=jnp.float32)          # (B*TP, Fp) f32
    emb = jnp.tanh(emb + b_emb_ref[...])                       # f32 (EUP)
    emb3 = emb.reshape(b_sz, tp, fp)                           # (B, TP, Fp)

    # ---- running [sum, max] pooling over the (gridded) patch axis ----
    sum_acc[...] = sum_acc[...] + jnp.sum(emb3, axis=1)
    max_acc[...] = jnp.maximum(max_acc[...], jnp.max(emb3, axis=1))

    @pl.when(p == pl.num_programs(0) - 1)
    def _finalize():
        # dropout: identity in eval mode.
        # TODO(synk): training-mode dropout (pltpu.prng_random_bits mask) not wired.
        mean_f = sum_acc[...] * (1.0 / num_patches)            # exact: sum * 1/P
        # image_embed = [mean | max] on the lane axis (128-aligned boundary);
        # fc_cls is a single bf16 MXU dot with the pre-concatenated weight.
        feat = jnp.concatenate([mean_f, max_acc[...]], axis=-1)  # (B, 2*Fp) f32
        out_ref[...] = (jnp.dot(feat.astype(jnp.bfloat16), w_cls_ref[...],
                                preferred_element_type=jnp.float32)
                        + b_cls_ref[...])                      # (B, NCp) f32


def _round_up(n, m):
    return ((n + m - 1) // m) * m


def _pad_axis(x, target, axis):
    pad = target - x.shape[axis]
    if pad <= 0:
        return x
    widths = [(0, 0)] * x.ndim
    widths[axis] = (0, pad)
    return jnp.pad(x, widths)


def prepare_video_classifier_params(w_emb, b_emb, w_cls_t, b_cls):
    """One-time weight preparation (hoisted out of the per-call forward).

    Pads the feature / class dims to full 128-lane tiles and casts the matmul
    weights to bf16.  Zero padding is exact: padded embed columns produce
    tanh(0)=0 features whose fc_cls weight rows are zero.
    """
    K, F = w_emb.shape
    two_f, NC = w_cls_t.shape
    assert two_f == 2 * F
    Fp = _round_up(F, 128)
    NCp = _round_up(NC, 128)

    w_emb_p = _pad_axis(w_emb, Fp, 1).astype(jnp.bfloat16)                # (K, Fp)
    b_emb_p = _pad_axis(b_emb.reshape(1, F).astype(jnp.float32), Fp, 1)   # (1, Fp)
    # fc_cls weight^T split into mean/max halves, each padded to (Fp, NCp),
    # then re-stacked so fc_cls is a single (B, 2Fp) @ (2Fp, NCp) dot.
    w_mean = _pad_axis(_pad_axis(w_cls_t[:F, :], Fp, 0), NCp, 1)
    w_max = _pad_axis(_pad_axis(w_cls_t[F:, :], Fp, 0), NCp, 1)
    w_cls_p = jnp.concatenate([w_mean, w_max], axis=0).astype(jnp.bfloat16)  # (2Fp, NCp)
    b_cls_p = _pad_axis(b_cls.reshape(1, NC).astype(jnp.float32), NCp, 1)    # (1, NCp)

    return {"w_emb": w_emb_p, "b_emb": b_emb_p, "w_cls": w_cls_p,
            "b_cls": b_cls_p, "num_classes": NC}


@functools.partial(jax.jit, static_argnames=("num_classes", "p_tile"))
def video_classifier_forward(patches, w_emb, b_emb, w_cls, b_cls, *,
                             num_classes, p_tile=None):
    """Per-call path: only the (already bf16) patches tensor is new each call."""
    B, P, K = patches.shape
    Fp = w_emb.shape[1]
    NCp = w_cls.shape[1]

    if p_tile is None:
        p_tile = P if P <= 512 else 512
    assert p_tile % 16 == 0, "p_tile must be a multiple of 16 (bf16 sublanes)"
    assert P % p_tile == 0, "P must divide evenly (no padded patch rows)"
    n_tiles = P // p_tile

    kernel = functools.partial(video_classifier_kernel, num_patches=P)

    out = pl.pallas_call(
        kernel,
        out_shape=jax.ShapeDtypeStruct((B, NCp), jnp.float32),
        grid=(n_tiles,),                       # patch axis = reduction axis
        in_specs=[
            pl.BlockSpec((B, p_tile, K), lambda p: (0, p, 0)),  # patch tile (bf16)
            pl.BlockSpec((K, Fp), lambda p: (0, 0)),            # embed weight (bf16)
            pl.BlockSpec((1, Fp), lambda p: (0, 0)),            # embed bias
            pl.BlockSpec((2 * Fp, NCp), lambda p: (0, 0)),      # fc_cls weight (bf16)
            pl.BlockSpec((1, NCp), lambda p: (0, 0)),           # fc_cls bias
        ],
        out_specs=pl.BlockSpec((B, NCp), lambda p: (0, 0)),     # resident accumulator
        scratch_shapes=[pltpu.VMEM((B, Fp), jnp.float32),       # running sum
                        pltpu.VMEM((B, Fp), jnp.float32)],      # running max
        compiler_params=pltpu.CompilerParams(
            dimension_semantics=("arbitrary",)),
    )(patches, w_emb, b_emb, w_cls, b_cls)

    return out[:, :num_classes]


def patchify(image, ph, pw, dtype=jnp.bfloat16):
    """NCTHW video -> (B, P, K) patches, K = C*ph*pw.

    The bf16 cast is fused into the patchify transpose (which already rewrites
    the tensor), so the kernel input needs no separate astype pass.
    """
    B, C, T, H, W = image.shape
    x = image.reshape(B, C, T, H // ph, ph, W // pw, pw)
    x = jnp.transpose(x, (0, 2, 3, 5, 1, 4, 6))            # (B, T, Hp, Wp, C, ph, pw)
    return x.reshape(B, T * (H // ph) * (W // pw), C * ph * pw).astype(dtype)


def reference_forward(patches, w_emb, b_emb, w_cls_t, b_cls,
                      embed_dtype=jnp.float32, cls_dtype=jnp.float32):
    pre = jnp.dot(patches.astype(embed_dtype), w_emb.astype(embed_dtype),
                  preferred_element_type=jnp.float32)            # (B, P, F)
    emb = jnp.tanh(pre + b_emb)
    feat = jnp.concatenate([emb.mean(axis=1), emb.max(axis=1)], -1)  # (B, 2F)
    return (jnp.dot(feat.astype(cls_dtype), w_cls_t.astype(cls_dtype),
                    preferred_element_type=jnp.float32) + b_cls)     # (B, NC)


if __name__ == "__main__":
    # Small, module-consistent shapes.
    B, C, T, H, W = 2, 4, 8, 16, 16
    ph = pw = 8
    num_features = 32            # vision_model.num_features
    num_classes = 8
    F = num_features
    K = C * ph * pw              # 256
    P = T * (H // ph) * (W // pw)  # 32 patches

    key = jax.random.PRNGKey(0)
    k_img, k_wemb, k_wcls = jax.random.split(key, 3)

    image = jax.random.normal(k_img, (B, C, T, H, W), dtype=jnp.float32)

    # Synthetic vision backbone params (deterministic).
    w_emb = 0.02 * jax.random.normal(k_wemb, (K, F), dtype=jnp.float32)
    b_emb = jnp.zeros((1, F), dtype=jnp.float32)
    # fc_cls: Linear(num_features*2, num_classes): weight ~ N(0, 0.01), bias = 0
    # (stored transposed as (2F, NC) for in-kernel x @ W).
    w_cls_t = 0.01 * jax.random.normal(k_wcls, (2 * F, num_classes),
                                       dtype=jnp.float32)
    b_cls = jnp.zeros((1, num_classes), dtype=jnp.float32)

    # One-time weight preparation (pad + bf16 cast) — NOT on the per-call path.
    params = prepare_video_classifier_params(w_emb, b_emb, w_cls_t, b_cls)

    # Per-call path: patchify (bf16 cast fused into its transpose) + kernel.
    patches = patchify(image, ph, pw)                       # (B, 32, 256) bf16
    logits = video_classifier_forward(
        patches, params["w_emb"], params["b_emb"], params["w_cls"],
        params["b_cls"], num_classes=params["num_classes"],
        p_tile=16)                                          # grid=(2,): exercises init/accum/finalize
    logits = jax.block_until_ready(logits)
    assert logits.shape == (B, num_classes)

    # Reference with the same bf16 matmul inputs (tight check of kernel math).
    patches_f32 = patchify(image, ph, pw, dtype=jnp.float32)
    ref_bf16 = reference_forward(patches_f32, w_emb, b_emb, w_cls_t, b_cls,
                                 embed_dtype=jnp.bfloat16, cls_dtype=jnp.bfloat16)
    assert jnp.allclose(logits, ref_bf16, atol=2e-3, rtol=2e-3), \
        "mismatch vs bf16-input reference"

    # Full-f32 module reference (loose tolerance accounts for bf16 matmul inputs).
    ref_f32 = reference_forward(patches_f32, w_emb, b_emb, w_cls_t, b_cls,
                                embed_dtype=jnp.float32, cls_dtype=jnp.float32)
    assert jnp.allclose(logits, ref_f32, atol=2e-2, rtol=2e-2), \
        "mismatch vs f32 reference"

    print("KERNEL_OK")
</pallas_src>

<mosaic_0001>
module attributes {stable_mosaic.version = 11 : i64} {
  func.func @video_classifier_kernel(%arg0: i32, %arg1: memref<2x16x256xbf16, #tpu.memory_space<vmem>>, %arg2: memref<256x128xbf16, #tpu.memory_space<vmem>>, %arg3: memref<1x128xf32, #tpu.memory_space<vmem>>, %arg4: memref<256x128xbf16, #tpu.memory_space<vmem>>, %arg5: memref<1x128xf32, #tpu.memory_space<vmem>>, %arg6: memref<2x128xf32, #tpu.memory_space<vmem>>, %arg7: memref<2x128xf32, #tpu.memory_space<vmem>>, %arg8: memref<2x128xf32, #tpu.memory_space<vmem>>) attributes {dimension_semantics = [#tpu.dimension_semantics<arbitrary>], iteration_bounds = array<i64: 2>, scalar_prefetch = 0 : i64, scratch_operands = 2 : i64, tpu.core_type = #tpu.core_type<tc>, window_params = [{transform_indices = @transform_0, window_bounds = array<i64: 2, 16, 256>}, {pipeline_mode = #tpu.pipeline_mode<synchronous>, transform_indices = @transform_1, window_bounds = array<i64: 256, 128>}, {pipeline_mode = #tpu.pipeline_mode<synchronous>, transform_indices = @transform_2, window_bounds = array<i64: 1, 128>}, {pipeline_mode = #tpu.pipeline_mode<synchronous>, transform_indices = @transform_3, window_bounds = array<i64: 256, 128>}, {pipeline_mode = #tpu.pipeline_mode<synchronous>, transform_indices = @transform_4, window_bounds = array<i64: 1, 128>}, {pipeline_mode = #tpu.pipeline_mode<synchronous>, transform_indices = @transform_5, window_bounds = array<i64: 2, 128>}]} {
    %c0_i32 = arith.constant 0 : i32
    %0 = arith.cmpi eq, %arg0, %c0_i32 : i32
    %1 = arith.extui %0 : i1 to i32
    %c0_i32_0 = arith.constant 0 : i32
    %2 = arith.cmpi ne, %1, %c0_i32_0 : i32
    scf.if %2 {
      %cst_18 = arith.constant 0.000000e+00 : f32
      %23 = vector.broadcast %cst_18 : f32 to vector<2x128xf32>
      %c0_19 = arith.constant 0 : index
      %c0_20 = arith.constant 0 : index
      %24 = vector.load %arg7[%c0_19, %c0_20] : memref<2x128xf32, #tpu.memory_space<vmem>>, vector<2x128xf32>
      tpu.vector_store %arg7[%c0_19, %c0_20], %23 {strides = array<i32>} : memref<2x128xf32, #tpu.memory_space<vmem>>, vector<2x128xf32>,
      %cst_21 = arith.constant 0xFF800000 : f32
      %25 = vector.broadcast %cst_21 : f32 to vector<2x128xf32>
      %c0_22 = arith.constant 0 : index
      %c0_23 = arith.constant 0 : index
      %26 = vector.load %arg8[%c0_22, %c0_23] : memref<2x128xf32, #tpu.memory_space<vmem>>, vector<2x128xf32>
      tpu.vector_store %arg8[%c0_22, %c0_23], %25 {strides = array<i32>} : memref<2x128xf32, #tpu.memory_space<vmem>>, vector<2x128xf32>,
    } else {
    }
    %c0 = arith.constant 0 : index
    %c0_1 = arith.constant 0 : index
    %c0_2 = arith.constant 0 : index
    %3 = vector.load %arg1[%c0, %c0_1, %c0_2] : memref<2x16x256xbf16, #tpu.memory_space<vmem>>, vector<2x16x256xbf16>
    %4 = vector.shape_cast %3 : vector<2x16x256xbf16> to vector<32x256xbf16>
    %c0_3 = arith.constant 0 : index
    %c0_4 = arith.constant 0 : index
    %5 = vector.load %arg2[%c0_3, %c0_4] : memref<256x128xbf16, #tpu.memory_space<vmem>>, vector<256x128xbf16>
    %cst = arith.constant dense<0.000000e+00> : vector<32x128xf32>
    %6 = tpu.matmul %4, %5, %cst {dimension_numbers = #tpu.dot_dimension_numbers<[1], [0], [0], [1], [0, 0, 1, 1], [], []>} : vector<32x256xbf16>, vector<256x128xbf16>, vector<32x128xf32> -> vector<32x128xf32>
    %c0_5 = arith.constant 0 : index
    %c0_6 = arith.constant 0 : index
    %7 = vector.load %arg3[%c0_5, %c0_6] : memref<1x128xf32, #tpu.memory_space<vmem>>, vector<1x128xf32>
    %8 = vector.broadcast %7 : vector<1x128xf32> to vector<32x128xf32>
    %9 = arith.addf %6, %8 : vector<32x128xf32>
    %10 = math.tanh %9 : vector<32x128xf32>
    %11 = vector.shape_cast %10 : vector<32x128xf32> to vector<2x16x128xf32>
    %c0_7 = arith.constant 0 : index
    %c0_8 = arith.constant 0 : index
    %12 = vector.load %arg7[%c0_7, %c0_8] : memref<2x128xf32, #tpu.memory_space<vmem>>, vector<2x128xf32>
    %cst_9 = arith.constant dense<0.000000e+00> : vector<2x128xf32>
    %13 = vector.multi_reduction <add>, %11, %cst_9 [1] : vector<2x16x128xf32> to vector<2x128xf32>
    %14 = arith.addf %12, %13 : vector<2x128xf32>
    %c0_10 = arith.constant 0 : index
    %c0_11 = arith.constant 0 : index
    %15 = vector.load %arg7[%c0_10, %c0_11] : memref<2x128xf32, #tpu.memory_space<vmem>>, vector<2x128xf32>
    tpu.vector_store %arg7[%c0_10, %c0_11], %14 {strides = array<i32>} : memref<2x128xf32, #tpu.memory_space<vmem>>, vector<2x128xf32>,
    %c0_12 = arith.constant 0 : index
    %c0_13 = arith.constant 0 : index
    %16 = vector.load %arg8[%c0_12, %c0_13] : memref<2x128xf32, #tpu.memory_space<vmem>>, vector<2x128xf32>
    %cst_14 = arith.constant dense<0xFF800000> : vector<2x128xf32>
    %17 = vector.multi_reduction <maximumf>, %11, %cst_14 [1] : vector<2x16x128xf32> to vector<2x128xf32>
    %18 = arith.maximumf %16, %17 : vector<2x128xf32>
    %c0_15 = arith.constant 0 : index
    %c0_16 = arith.constant 0 : index
    %19 = vector.load %arg8[%c0_15, %c0_16] : memref<2x128xf32, #tpu.memory_space<vmem>>, vector<2x128xf32>
    tpu.vector_store %arg8[%c0_15, %c0_16], %18 {strides = array<i32>} : memref<2x128xf32, #tpu.memory_space<vmem>>, vector<2x128xf32>,
    %c1_i32 = arith.constant 1 : i32
    %20 = arith.cmpi eq, %arg0, %c1_i32 : i32
    %21 = arith.extui %20 : i1 to i32
    %c0_i32_17 = arith.constant 0 : i32
    %22 = arith.cmpi ne, %21, %c0_i32_17 : i32
    scf.if %22 {
      %c0_18 = arith.constant 0 : index
      %c0_19 = arith.constant 0 : index
      %23 = vector.load %arg7[%c0_18, %c0_19] : memref<2x128xf32, #tpu.memory_space<vmem>>, vector<2x128xf32>
      %cst_20 = arith.constant 3.125000e-02 : f32
      %24 = vector.broadcast %cst_20 : f32 to vector<2x128xf32>
      %25 = arith.mulf %23, %24 : vector<2x128xf32>
      %c0_21 = arith.constant 0 : index
      %c0_22 = arith.constant 0 : index
      %26 = vector.load %arg8[%c0_21, %c0_22] : memref<2x128xf32, #tpu.memory_space<vmem>>, vector<2x128xf32>
      %27 = tpu.concatenate %25, %26 in 1 : vector<2x128xf32>, vector<2x128xf32> -> vector<2x256xf32>
      %28 = arith.truncf %27 : vector<2x256xf32> to vector<2x256xbf16>
      %c0_23 = arith.constant 0 : index
      %c0_24 = arith.constant 0 : index
      %29 = vector.load %arg4[%c0_23, %c0_24] : memref<256x128xbf16, #tpu.memory_space<vmem>>, vector<256x128xbf16>
      %cst_25 = arith.constant dense<0.000000e+00> : vector<2x128xf32>
      %30 = tpu.matmul %28, %29, %cst_25 {dimension_numbers = #tpu.dot_dimension_numbers<[1], [0], [0], [1], [0, 0, 1, 1], [], []>} : vector<2x256xbf16>, vector<256x128xbf16>, vector<2x128xf32> -> vector<2x128xf32>
      %c0_26 = arith.constant 0 : index
      %c0_27 = arith.constant 0 : index
      %31 = vector.load %arg5[%c0_26, %c0_27] : memref<1x128xf32, #tpu.memory_space<vmem>>, vector<1x128xf32>
      %32 = vector.broadcast %31 : vector<1x128xf32> to vector<2x128xf32>
      %33 = arith.addf %30, %32 : vector<2x128xf32>
      %c0_28 = arith.constant 0 : index
      %c0_29 = arith.constant 0 : index
      %34 = vector.load %arg6[%c0_28, %c0_29] : memref<2x128xf32, #tpu.memory_space<vmem>>, vector<2x128xf32>
      tpu.vector_store %arg6[%c0_28, %c0_29], %33 {strides = array<i32>} : memref<2x128xf32, #tpu.memory_space<vmem>>, vector<2x128xf32>,
    } else {
    }
    return
  }
  func.func @transform_0(%arg0: i32) -> (i32, i32, i32) {
    %c0_i32 = arith.constant 0 : i32
    %c0_i32_0 = arith.constant 0 : i32
    %c0_i32_1 = arith.constant 0 : i32
    return %c0_i32, %arg0, %c0_i32_0 : i32, i32, i32
  }
  func.func @transform_1(%arg0: i32) -> (i32, i32) {
    %c0_i32 = arith.constant 0 : i32
    %c0_i32_0 = arith.constant 0 : i32
    %c0_i32_1 = arith.constant 0 : i32
    return %c0_i32, %c0_i32_0 : i32, i32
  }
  func.func @transform_2(%arg0: i32) -> (i32, i32) {
    %c0_i32 = arith.constant 0 : i32
    %c0_i32_0 = arith.constant 0 : i32
    %c0_i32_1 = arith.constant 0 : i32
    return %c0_i32, %c0_i32_0 : i32, i32
  }
  func.func @transform_3(%arg0: i32) -> (i32, i32) {
    %c0_i32 = arith.constant 0 : i32
    %c0_i32_0 = arith.constant 0 : i32
    %c0_i32_1 = arith.constant 0 : i32
    return %c0_i32, %c0_i32_0 : i32, i32
  }
  func.func @transform_4(%arg0: i32) -> (i32, i32) {
    %c0_i32 = arith.constant 0 : i32
    %c0_i32_0 = arith.constant 0 : i32
    %c0_i32_1 = arith.constant 0 : i32
    return %c0_i32, %c0_i32_0 : i32, i32
  }
  func.func @transform_5(%arg0: i32) -> (i32, i32) {
    %c0_i32 = arith.constant 0 : i32
    %c0_i32_0 = arith.constant 0 : i32
    %c0_i32_1 = arith.constant 0 : i32
    return %c0_i32, %c0_i32_0 : i32, i32
  }
}

</mosaic_0001>

<llo_original>
// kernel: video_classifier_forward.1
$region0: #{video_classifier_forward.1}
  #allocation0 [shape = 'u32[]', space=smem, size = 0x4, offset = 0x4, fixed_abs, tag = 'smem constant byte address 0x4 - core index']
  #allocation1 [shape = 'u32[72,128]{1,0:T(1,128)}', space=vmem, size = 0x9000, scoped, tag = 'internal scratch']
  #allocation2 [shape = 'f32[2,128]{1,0:T(2,128)}', space=vmem, size = 0x400, scoped, tag = 'scratch operand']
  #allocation3 [shape = 'f32[2,128]{1,0:T(2,128)}', space=vmem, size = 0x400, scoped, tag = 'scratch operand']
  #allocation11 [shape = 's32[]', space=sflag, size = 0x4, offset = 0, fixed_abs, tag = 'sflag constant byte address 0x0 - dummy sync flag']
  %s0 = inlined_call_operand.hbm [shape: bf16[2,32,256], index: 0, kind: input, shape index: {}]
  %s1 = inlined_call_operand.hbm [shape: bf16[256,128], index: 1, kind: input, shape index: {}]
  %s2 = inlined_call_operand.vmem [shape: f32[1,128], index: 2, kind: input, shape index: {}]
  %s3 = inlined_call_operand.hbm [shape: bf16[256,128], index: 3, kind: input, shape index: {}]
  %s4 = inlined_call_operand.vmem [shape: f32[1,128], index: 4, kind: input, shape index: {}]
  %s5 = inlined_call_operand.hbm [shape: f32[2,128], index: 5, kind: output, shape index: {}]
  %s6 = sld [smem:[#allocation0]]
  $region73: #{video_classifier_forward.1} parent=0
    _
  %s8 = ssub.s32 1, %s6
  %s9 = scalar_select 0, %s8, %s6
  $region1: #{video_classifier_forward.1} parent=0
    #allocation4 [shape = 'u8[32768]{0}', space=vmem, size = 0x8000, scoped, tag = 'input window, operand 0']
    #allocation5 [shape = 's32[2]{0}', space=sflag, size = 0x8, scoped, tag = 'scoped memory for video_classifier_forward.1']
    #allocation6 [shape = 's32[2]{0}', space=sflag, size = 0x8, scoped, tag = 'scoped memory for video_classifier_forward.1']
    #allocation7 [shape = 'u8[65536]{0}', space=vmem, size = 0x10000, scoped, tag = 'input window, operand 1, single buffered']
    #allocation8 [shape = 's32[1]{0}', space=sflag, size = 0x4, scoped, tag = 'scoped memory for video_classifier_forward.1']
    #allocation9 [shape = 'u8[65536]{0}', space=vmem, size = 0x10000, scoped, tag = 'input window, operand 3, single buffered']
    #allocation10 [shape = 'u8[1024]{0}', space=vmem, size = 0x400, scoped, tag = 'output window, operand 0, single buffered']
    %10 = vsyncpa [#allocation5], 0
    %s11 = scalar_lea.sflag [#allocation5], 1
    %12 = vsyncpa %s11, 0
    %13 = vsyncpa [#allocation8], 0
    %14 = vsyncpa [#allocation6], 0
    loop: start=0, step=1, limit=4
    $region2: #{video_classifier_forward.1} parent=1 // loop_pre_header
      _
    $region3: #{video_classifier_forward.1} parent=1 // loop_header
      %s16 = sphi 0, %s20
      %p17 = scmp.ge.s32.totalorder %s16, 4
      %s26 = sphi 0, %s28
      %s29 = sphi 0, %s26
      %s30 = sphi 0, %s29
      %s46 = sphi 0, %s30
      %s50 = sphi 0, %s50
      %s52 = sphi 0, %s50
      %s53 = sphi 0, %s52
      %s67 = sphi 0, %s53
      %s71 = sphi 0, %s71
      %s73 = sphi 0, %s71
      %s74 = sphi 0, %s73
      %s88 = sphi 0, %s74
      %s92 = sphi 0, %s92
      %s94 = sphi 0, %s92
      %s95 = sphi 0, %s94
      %s109 = sphi 0, %s95
      %s113 = sphi 0, %s113
      %s115 = sphi 0, %s113
      %s116 = sphi 0, %s115
      %s130 = sphi 0, %s116
      %s134 = sphi 0, %s134
      %s136 = sphi 0, %s134
      %s137 = sphi 0, %s136
      %s151 = sphi 0, %s137
    $region4: #{video_classifier_forward.1} parent=1 // loop_header_branch
      %19 = sbr.rel (%p17) target = $region8
    $region5: #{video_classifier_forward.1} parent=1 // loop_body
      %s21 = ssub.s32 %s16, 1
      %s22 = ssub.s32 %s16, 2
      %s23 = sadd.s32 %s16, 1
      %s24 = ssub.s32 %s16, %s23
      %p25 = scmp.eq.s32.totalorder %s24, 0
      %s27 = sadd.s32 %s26, 1
      %s28 = scalar_select %p25, %s26, %s27
      %p31 = pneg %p25
      %p32 = scmp.eq.s32.totalorder %s16, 1
      %p33 = por %p31, %p32
      %p34 = scmp.ne.s32.totalorder %s26, %s29
      %p35 = scmp.eq.s32.totalorder %s16, 0
      %p36 = por %p34, %p35
      %p37 = scmp.ne.s32.totalorder %s26, %s29
      %p38 = scmp.eq.s32.totalorder %s21, 1
      %p39 = por %p37, %p38
      %p40 = scmp.ne.s32.totalorder %s29, %s30
      %p41 = scmp.eq.s32.totalorder %s21, 0
      %p42 = por %p40, %p41
      %p43 = scmp.ne.s32.totalorder %s29, %s30
      %p44 = scmp.eq.s32.totalorder %s22, 1
      %p45 = por %p43, %p44
      %p47 = scmp.ne.s32.totalorder %s30, %s46
      %p48 = scmp.eq.s32.totalorder %s22, 0
      %p49 = por %p47, %p48
      %s51 = sadd.s32 %s50, 1
      %p54 = scmp.eq.s32.totalorder %s16, 1
      %p55 = scmp.ne.s32.totalorder %s50, %s52
      %p56 = scmp.eq.s32.totalorder %s16, 0
      %p57 = por %p55, %p56
      %p58 = scmp.ne.s32.totalorder %s50, %s52
      %p59 = scmp.eq.s32.totalorder %s21, 1
      %p60 = por %p58, %p59
      %p61 = scmp.ne.s32.totalorder %s52, %s53
      %p62 = scmp.eq.s32.totalorder %s21, 0
      %p63 = por %p61, %p62
      %p64 = scmp.ne.s32.totalorder %s52, %s53
      %p65 = scmp.eq.s32.totalorder %s22, 1
      %p66 = por %p64, %p65
      %p68 = scmp.ne.s32.totalorder %s53, %s67
      %p69 = scmp.eq.s32.totalorder %s22, 0
      %p70 = por %p68, %p69
      %s72 = sadd.s32 %s71, 1
      %p75 = scmp.eq.s32.totalorder %s16, 1
      %p76 = scmp.ne.s32.totalorder %s71, %s73
      %p77 = scmp.eq.s32.totalorder %s16, 0
      %p78 = por %p76, %p77
      %p79 = scmp.ne.s32.totalorder %s71, %s73
      %p80 = scmp.eq.s32.totalorder %s21, 1
      %p81 = por %p79, %p80
      %p82 = scmp.ne.s32.totalorder %s73, %s74
      %p83 = scmp.eq.s32.totalorder %s21, 0
      %p84 = por %p82, %p83
      %p85 = scmp.ne.s32.totalorder %s73, %s74
      %p86 = scmp.eq.s32.totalorder %s22, 1
      %p87 = por %p85, %p86
      %p89 = scmp.ne.s32.totalorder %s74, %s88
      %p90 = scmp.eq.s32.totalorder %s22, 0
      %p91 = por %p89, %p90
      %s93 = sadd.s32 %s92, 1
      %p96 = scmp.eq.s32.totalorder %s16, 1
      %p97 = scmp.ne.s32.totalorder %s92, %s94
      %p98 = scmp.eq.s32.totalorder %s16, 0
      %p99 = por %p97, %p98
      %p100 = scmp.ne.s32.totalorder %s92, %s94
      %p101 = scmp.eq.s32.totalorder %s21, 1
      %p102 = por %p100, %p101
      %p103 = scmp.ne.s32.totalorder %s94, %s95
      %p104 = scmp.eq.s32.totalorder %s21, 0
      %p105 = por %p103, %p104
      %p106 = scmp.ne.s32.totalorder %s94, %s95
      %p107 = scmp.eq.s32.totalorder %s22, 1
      %p108 = por %p106, %p107
      %p110 = scmp.ne.s32.totalorder %s95, %s109
      %p111 = scmp.eq.s32.totalorder %s22, 0
      %p112 = por %p110, %p111
      %s114 = sadd.s32 %s113, 1
      %p117 = scmp.eq.s32.totalorder %s16, 1
      %p118 = scmp.ne.s32.totalorder %s113, %s115
      %p119 = scmp.eq.s32.totalorder %s16, 0
      %p120 = por %p118, %p119
      %p121 = scmp.ne.s32.totalorder %s113, %s115
      %p122 = scmp.eq.s32.totalorder %s21, 1
      %p123 = por %p121, %p122
      %p124 = scmp.ne.s32.totalorder %s115, %s116
      %p125 = scmp.eq.s32.totalorder %s21, 0
      %p126 = por %p124, %p125
      %p127 = scmp.ne.s32.totalorder %s115, %s116
      %p128 = scmp.eq.s32.totalorder %s22, 1
      %p129 = por %p127, %p128
      %p131 = scmp.ne.s32.totalorder %s116, %s130
      %p132 = scmp.eq.s32.totalorder %s22, 0
      %p133 = por %p131, %p132
      %s135 = sadd.s32 %s134, 1
      %p138 = scmp.eq.s32.totalorder %s16, 1
      %p139 = scmp.ne.s32.totalorder %s134, %s136
      %p140 = scmp.eq.s32.totalorder %s16, 0
      %p141 = por %p139, %p140
      %p142 = scmp.ne.s32.totalorder %s134, %s136
      %p143 = scmp.eq.s32.totalorder %s21, 1
      %p144 = por %p142, %p143
      %p145 = scmp.ne.s32.totalorder %s136, %s137
      %p146 = scmp.eq.s32.totalorder %s21, 0
      %p147 = por %p145, %p146
      %p148 = scmp.ne.s32.totalorder %s136, %s137
      %p149 = scmp.eq.s32.totalorder %s22, 1
      %p150 = por %p148, %p149
      %p152 = scmp.ne.s32.totalorder %s137, %s151
      %p153 = scmp.eq.s32.totalorder %s22, 0
      %p154 = por %p152, %p153
      %p155 = scmp.le.s32.totalorder 1, %s16
      %p156 = scmp.lt.s32.totalorder %s16, 3
      %p157 = pnand %p155, %p156
      %p158 = pneg %p157
      // Predicated region
      $region9: #{video_classifier_forward.1} parent=5 // pred_check
        _
      $region10: #{video_classifier_forward.1} parent=5 // pred_check_branch
        %160 = sbr.rel (%p157) target = $region12
      $region11: #{video_classifier_forward.1} parent=5 // pred_region
        %s161 = ssub.s32 %s16, 1
        // Predicated region
        $region13: #{video_classifier_forward.1} parent=11 // pred_check
          %p162 = pneg %p63
        $region14: #{video_classifier_forward.1} parent=11 // pred_check_branch
          %164 = sbr.rel (%p162) target = $region16
        $region15: #{video_classifier_forward.1} parent=11 // pred_region
          %166 = vsyncadd [#allocation8], 0
          %s167 = sshll.u32 %s1, 4
          %s168 = int_to_ptr.hbm [resolvable:$true] %s167
          %s169 = sshll.u32 [#allocation7], 4
          %s170 = int_to_ptr.vmem [resolvable:$true] %s169
          %175 = dma.hbm_to_vmem [thread:$0]  %s168, 2048, %s170, [#allocation8], 64, 64, 4
        $region16: #{video_classifier_forward.1} parent=11 // pred_fallthru
          _
        // Predicated region
        $region17: #{video_classifier_forward.1} parent=11 // pred_check
          %p176 = pneg %p84
        $region18: #{video_classifier_forward.1} parent=11 // pred_check_branch
          %178 = sbr.rel (%p176) target = $region20
        $region19: #{video_classifier_forward.1} parent=11 // pred_region
          _
        $region20: #{video_classifier_forward.1} parent=11 // pred_fallthru
          _
        // Predicated region
        $region21: #{video_classifier_forward.1} parent=11 // pred_check
          %p179 = pneg %p105
        $region22: #{video_classifier_forward.1} parent=11 // pred_check_branch
          %181 = sbr.rel (%p179) target = $region24
        $region23: #{video_classifier_forward.1} parent=11 // pred_region
          %183 = vsyncadd [#allocation8], 0
          %s184 = sshll.u32 %s3, 4
          %s185 = int_to_ptr.hbm [resolvable:$true] %s184
          %s186 = sshll.u32 [#allocation9], 4
          %s187 = int_to_ptr.vmem [resolvable:$true] %s186
          %192 = dma.hbm_to_vmem [thread:$0]  %s185, 2048, %s187, [#allocation8], 64, 64, 4
        $region24: #{video_classifier_forward.1} parent=11 // pred_fallthru
          _
        // Predicated region
        $region25: #{video_classifier_forward.1} parent=11 // pred_check
          %p193 = pneg %p126
        $region26: #{video_classifier_forward.1} parent=11 // pred_check_branch
          %195 = sbr.rel (%p193) target = $region28
        $region27: #{video_classifier_forward.1} parent=11 // pred_region
          _
        $region28: #{video_classifier_forward.1} parent=11 // pred_fallthru
          _
      $region12: #{video_classifier_forward.1} parent=5 // pred_fallthru
        _
      %p196 = scmp.lt.s32.totalorder %s16, 2
      // Predicated region
      $region29: #{video_classifier_forward.1} parent=5 // pred_check
        %p197 = pneg %p196
      $region30: #{video_classifier_forward.1} parent=5 // pred_check_branch
        %199 = sbr.rel (%p197) target = $region32
      $region31: #{video_classifier_forward.1} parent=5 // pred_region
        // Predicated region
        $region33: #{video_classifier_forward.1} parent=31 // pred_check
          %p200 = pneg %p36
        $region34: #{video_classifier_forward.1} parent=31 // pred_check_branch
          %202 = sbr.rel (%p200) target = $region36
        $region35: #{video_classifier_forward.1} parent=31 // pred_region
          #allocation12 [shape = 'u32[6]{0}', space=smem, size = 0x18, scoped, tag = 'DMA stride descriptor']
          %s203 = sand.u32 %s26, 1
          %s204 = scalar_lea.sflag [#allocation5], %s203
          %s205 = sand.u32 %s26, 1
          %s206 = smul.addr %s205, 32
          %s207 = scalar_lea.vmem [#allocation4], %s206
          %s208 = smul.u32 2, %s16
          %210 = vsyncadd %s204, 0
          %s211 = smul.addr %s208, 2
          %s212 = smul.addr %s211, 4
          %s213 = scalar_lea.hbm %s0, %s212
          %s215 = sshll.u32 1, 14
          %s216 = sxor.u32 4294967295, %s215
          %s218 = sld [smem:[#allocation0]]
          %s219 = sadd.s32 2, %s218
          %s221 = sshll.u32 7, 26
          %s222 = sxor.u32 4294967295, %s221
          %s223 = sand.u32 0, %s222
          %s224 = sshll.u32 %s219, 26
          %s225 = sor.u32 %s223, %s224
          %s226 = sshll.u32 %s213, 4
          %s227 = int_to_ptr.hbm [resolvable:$true] %s226
          %s228 = sshll.u32 %s207, 4
          %s229 = int_to_ptr.vmem [resolvable:$true] %s228
          %235 = sst [smem:[#allocation12]] 512
          %s236 = scalar_lea.smem [#allocation12], 1
          %237 = sst [smem:[%s236]] 256
          %s238 = scalar_lea.smem [#allocation12], 2
          %239 = sst [smem:[%s238]] 2
          %s240 = scalar_lea.smem [#allocation12], 3
          %241 = sst [smem:[%s240]] 128
          %s242 = scalar_lea.smem [#allocation12], 4
          %243 = sst [smem:[%s242]] 128
          %s244 = scalar_lea.smem [#allocation12], 5
          %245 = sst [smem:[%s244]] 8
          %247 = dma.general %s227, 512, %s229, %s204, [#allocation11], [#allocation12], %s225, 0
        $region36: #{video_classifier_forward.1} parent=31 // pred_fallthru
          _
      $region32: #{video_classifier_forward.1} parent=5 // pred_fallthru
        _
      %p248 = scmp.le.s32.totalorder 1, %s16
      %p249 = scmp.lt.s32.totalorder %s16, 3
      %p250 = pnand %p248, %p249
      %p251 = pneg %p250
      // Predicated region
      $region37: #{video_classifier_forward.1} parent=5 // pred_check
        _
      $region38: #{video_classifier_forward.1} parent=5 // pred_check_branch
        %253 = sbr.rel (%p250) target = $region40
      $region39: #{video_classifier_forward.1} parent=5 // pred_region
        %s254 = ssub.s32 %s16, 1
        %s255 = sand.u32 %s29, 1
        %s256 = scalar_lea.sflag [#allocation5], %s255
        %s257 = sand.u32 %s29, 1
        %s258 = smul.addr %s257, 32
        %s259 = scalar_lea.vmem [#allocation4], %s258
        // Predicated region
        $region41: #{video_classifier_forward.1} parent=39 // pred_check
          %p260 = pneg %p42
        $region42: #{video_classifier_forward.1} parent=39 // pred_check_branch
          %262 = sbr.rel (%p260) target = $region44
        $region43: #{video_classifier_forward.1} parent=39 // pred_region
          %264 = dma.done %s256, 512
        $region44: #{video_classifier_forward.1} parent=39 // pred_fallthru
          _
        // Predicated region
        $region45: #{video_classifier_forward.1} parent=39 // pred_check
          %p265 = pneg %p63
        $region46: #{video_classifier_forward.1} parent=39 // pred_check_branch
          %267 = sbr.rel (%p265) target = $region48
        $region47: #{video_classifier_forward.1} parent=39 // pred_region
          %269 = dma.done [#allocation8], 2048
        $region48: #{video_classifier_forward.1} parent=39 // pred_fallthru
          _
        // Predicated region
        $region49: #{video_classifier_forward.1} parent=39 // pred_check
          %p270 = pneg %p105
        $region50: #{video_classifier_forward.1} parent=39 // pred_check_branch
          %272 = sbr.rel (%p270) target = $region52
        $region51: #{video_classifier_forward.1} parent=39 // pred_region
          %274 = dma.done [#allocation8], 2048
        $region52: #{video_classifier_forward.1} parent=39 // pred_fallthru
          _
        %s275 = sand.u32 %s29, 1
        %s276 = scalar_lea.sflag [#allocation5], %s275
        %s277 = sand.u32 %s29, 1
        %s278 = smul.addr %s277, 32
        %s279 = scalar_lea.vmem [#allocation4], %s278
        %p280 = pneg %p42
        %p281 = pneg %p39
        %p282 = pneg %p63
        %p283 = pneg %p60
        %p284 = pneg %p84
        %p285 = pneg %p81
        %p286 = pneg %p105
        %p287 = pneg %p102
        %p288 = pneg %p126
        %p289 = pneg %p123
        %p290 = pneg %p147
        %p291 = pneg %p144
        %s292 = smul.u32 2, %s21
        %p293 = scmp.eq.s32.totalorder %s21, 0
        // Predicated region
        $region53: #{video_classifier_forward.1} parent=39 // pred_check
          %p294 = pneg %p293
        $region54: #{video_classifier_forward.1} parent=39 // pred_check_branch
          %296 = sbr.rel (%p294) target = $region56
        $region55: #{video_classifier_forward.1} parent=39 // pred_region
          %297 = vst [vmem:[#allocation2] sm:$0x3] 0.0
          %298 = vst [vmem:[#allocation3] sm:$0x3] -inf
        $region56: #{video_classifier_forward.1} parent=39 // pred_fallthru
          _
        %v299 = vld [vmem:[%s259] sm:$0xff]
        %v300 = vld [vmem:[%s259 + $0x8] sm:$0xff]
        %v301 = vld [vmem:[%s259 + $0x10] sm:$0xff]
        %v302 = vld [vmem:[%s259 + $0x18] sm:$0xff]
        %v303 = vld [vmem:[#allocation7] sm:$0xf]
        %v304 = vld [vmem:[#allocation7 + $0x4] sm:$0xf]
        %v305 = vld [vmem:[#allocation7 + $0x8] sm:$0xf]
        %v306 = vld [vmem:[#allocation7 + $0xc] sm:$0xf]
        %v307 = vld [vmem:[#allocation7 + $0x10] sm:$0xf]
        %v308 = vld [vmem:[#allocation7 + $0x14] sm:$0xf]
        %v309 = vld [vmem:[#allocation7 + $0x18] sm:$0xf]
        %v310 = vld [vmem:[#allocation7 + $0x1c] sm:$0xf]
        %v311 = vld [vmem:[#allocation7 + $0x20] sm:$0xf]
        %v312 = vld [vmem:[#allocation7 + $0x24] sm:$0xf]
        %v313 = vld [vmem:[#allocation7 + $0x28] sm:$0xf]
        %v314 = vld [vmem:[#allocation7 + $0x2c] sm:$0xf]
        %v315 = vld [vmem:[#allocation7 + $0x30] sm:$0xf]
        %v316 = vld [vmem:[#allocation7 + $0x34] sm:$0xf]
        %v317 = vld [vmem:[#allocation7 + $0x38] sm:$0xf]
        %v318 = vld [vmem:[#allocation7 + $0x3c] sm:$0xf]
        %v319 = vld [vmem:[#allocation7 + $0x40] sm:$0xf]
        %v320 = vld [vmem:[#allocation7 + $0x44] sm:$0xf]
        %v321 = vld [vmem:[#allocation7 + $0x48] sm:$0xf]
        %v322 = vld [vmem:[#allocation7 + $0x4c] sm:$0xf]
        %v323 = vld [vmem:[#allocation7 + $0x50] sm:$0xf]
        %v324 = vld [vmem:[#allocation7 + $0x54] sm:$0xf]
        %v325 = vld [vmem:[#allocation7 + $0x58] sm:$0xf]
        %v326 = vld [vmem:[#allocation7 + $0x5c] sm:$0xf]
        %v327 = vld [vmem:[#allocation7 + $0x60] sm:$0xf]
        %v328 = vld [vmem:[#allocation7 + $0x64] sm:$0xf]
        %v329 = vld [vmem:[#allocation7 + $0x68] sm:$0xf]
        %v330 = vld [vmem:[#allocation7 + $0x6c] sm:$0xf]
        %v331 = vld [vmem:[#allocation7 + $0x70] sm:$0xf]
        %v332 = vld [vmem:[#allocation7 + $0x74] sm:$0xf]
        %v333 = vld [vmem:[#allocation7 + $0x78] sm:$0xf]
        %v334 = vld [vmem:[#allocation7 + $0x7c] sm:$0xf]
        %v335 = vld [vmem:[%s2] sm:$0x1]
        %v337 = vperm.slane %v335, 0
        %v343 = vunpack.c.l.b16 %v299
        %v344 = vunpack.c.h.b16 %v299
        %v345 = vunpack.c.l.b16 %v300
        %v346 = vunpack.c.h.b16 %v300
        %v347 = vunpack.c.l.b16 %v301
        %v348 = vunpack.c.h.b16 %v301
        %v349 = vunpack.c.l.b16 %v302
        %v350 = vunpack.c.h.b16 %v302
        %v351 = vpack.c.b16 %v345, %v343
        %v352 = vpack.c.b16 %v346, %v344
        %v353 = vpack.c.b16 %v349, %v347
        %v354 = vpack.c.b16 %v350, %v348
        %v391 = vunpack.c.l.b16 %v303
        %v392 = vunpack.c.l.b16 %v304
        %v393 = vunpack.c.l.b16 %v305
        %v394 = vunpack.c.l.b16 %v306
        %v395 = vunpack.c.l.b16 %v307
        %v396 = vunpack.c.l.b16 %v308
        %v397 = vunpack.c.l.b16 %v309
        %v398 = vunpack.c.l.b16 %v310
        %v399 = vunpack.c.l.b16 %v311
        %v400 = vunpack.c.l.b16 %v312
        %v401 = vunpack.c.l.b16 %v313
        %v402 = vunpack.c.l.b16 %v314
        %v403 = vunpack.c.l.b16 %v315
        %v404 = vunpack.c.l.b16 %v316
        %v405 = vunpack.c.l.b16 %v317
        %v406 = vunpack.c.l.b16 %v318
        %v407 = vunpack.c.l.b16 %v319
        %v408 = vunpack.c.l.b16 %v320
        %v409 = vunpack.c.l.b16 %v321
        %v410 = vunpack.c.l.b16 %v322
        %v411 = vunpack.c.l.b16 %v323
        %v412 = vunpack.c.l.b16 %v324
        %v413 = vunpack.c.l.b16 %v325
        %v414 = vunpack.c.l.b16 %v326
        %v415 = vunpack.c.l.b16 %v327
        %v416 = vunpack.c.l.b16 %v328
        %v417 = vunpack.c.l.b16 %v329
        %v418 = vunpack.c.l.b16 %v330
        %v419 = vunpack.c.l.b16 %v331
        %v420 = vunpack.c.l.b16 %v332
        %v421 = vunpack.c.l.b16 %v333
        %v422 = vunpack.c.l.b16 %v334
        %v423 = vpack.c.b16 %v392, %v391
        %v424 = vpack.c.b16 %v394, %v393
        %v425 = vpack.c.b16 %v396, %v395
        %v426 = vpack.c.b16 %v398, %v397
        %v427 = vpack.c.b16 %v400, %v399
        %v428 = vpack.c.b16 %v402, %v401
        %v429 = vpack.c.b16 %v404, %v403
        %v430 = vpack.c.b16 %v406, %v405
        %v431 = vpack.c.b16 %v408, %v407
        %v432 = vpack.c.b16 %v410, %v409
        %v433 = vpack.c.b16 %v412, %v411
        %v434 = vpack.c.b16 %v414, %v413
        %v435 = vpack.c.b16 %v416, %v415
        %v436 = vpack.c.b16 %v418, %v417
        %v437 = vpack.c.b16 %v420, %v419
        %v438 = vpack.c.b16 %v422, %v421
        %455 = vmatpush.bf16.msra.mxu0 %v430
        %456 = vmatpush.bf16.msra.mxu0 %v429
        %457 = vmatpush.bf16.msra.mxu0 %v428
        %458 = vmatpush.bf16.msra.mxu0 %v427
        %459 = vmatpush.bf16.msra.mxu0 %v426
        %460 = vmatpush.bf16.msra.mxu0 %v425
        %461 = vmatpush.bf16.msra.mxu0 %v424
        %462 = vmatpush.bf16.msra.mxu0 %v423
        %463 = vmatmul.bf16.gmra.mxu0 %v351
        %v464 = vpop.f32.mrf.mxu0
        %v465 = vadd.f32 %v337, %v464
        %v466 = vpop.f32.mrf.mxu0
        %v467 = vadd.f32 %v337, %v466
        %468 = vmatmul.bf16.gmra.mxu0 %v353
        %v469 = vpop.f32.mrf.mxu0
        %v470 = vadd.f32 %v337, %v469
        %v471 = vpop.f32.mrf.mxu0
        %v472 = vadd.f32 %v337, %v471
        %473 = vdwg.mxu0
        %474 = vmatpush.bf16.msra.mxu0 %v438
        %475 = vmatpush.bf16.msra.mxu0 %v437
        %476 = vmatpush.bf16.msra.mxu0 %v436
        %477 = vmatpush.bf16.msra.mxu0 %v435
        %478 = vmatpush.bf16.msra.mxu0 %v434
        %479 = vmatpush.bf16.msra.mxu0 %v433
        %480 = vmatpush.bf16.msra.mxu0 %v432
        %481 = vmatpush.bf16.msra.mxu0 %v431
        %482 = vmatmul.bf16.gmra.mxu0 %v352
        %v483 = vpop.f32.mrf.mxu0
        %v484 = vadd.f32 %v465, %v483
        %v485 = vpop.f32.mrf.mxu0
        %v486 = vadd.f32 %v467, %v485
        %487 = vmatmul.bf16.gmra.mxu0 %v354
        %v488 = vpop.f32.mrf.mxu0
        %v489 = vadd.f32 %v470, %v488
        %v490 = vpop.f32.mrf.mxu0
        %v491 = vadd.f32 %v472, %v490
        %492 = vdwg.mxu0
        %v493 = vtanh.pop %v484
        %v494 = vtanh.pop %v486
        %v495 = vtanh.pop %v489
        %v496 = vtanh.pop %v491
        %v497 = vld [vmem:[#allocation2] sm:$0x3]
        %v498 = vadd.f32 %v493, %v494
        %v499 = vrot.slane %v498, 4
        %v500 = vadd.f32 %v498, %v499
        %v501 = vrot.slane %v500, 2
        %v502 = vadd.f32 %v500, %v501
        %v503 = vrot.slane %v502, 1
        %v504 = vadd.f32 %v502, %v503
        %v505 = vadd.f32 %v495, %v496
        %v506 = vrot.slane %v505, 4
        %v507 = vadd.f32 %v505, %v506
        %v508 = vrot.slane %v507, 2
        %v509 = vadd.f32 %v507, %v508
        %v510 = vrot.slane %v509, 1
        %v511 = vadd.f32 %v509, %v510
        %vm514 = vcmask 1041409
        %v515 = vsel %vm514, %v511, %v504
        %v517 = vadd.f32 %v497, %v515
        %518 = vst [vmem:[#allocation2] sm:$0x3] %v517
        %v519 = vld [vmem:[#allocation3] sm:$0x3]
        %v520 = vmax.f32 %v493, %v494
        %v521 = vrot.slane %v520, 4
        %v522 = vmax.f32 %v520, %v521
        %v523 = vrot.slane %v522, 2
        %v524 = vmax.f32 %v522, %v523
        %v525 = vrot.slane %v524, 1
        %v526 = vmax.f32 %v524, %v525
        %v527 = vmax.f32 %v495, %v496
        %v528 = vrot.slane %v527, 4
        %v529 = vmax.f32 %v527, %v528
        %v530 = vrot.slane %v529, 2
        %v531 = vmax.f32 %v529, %v530
        %v532 = vrot.slane %v531, 1
        %v533 = vmax.f32 %v531, %v532
        %v536 = vsel %vm514, %v533, %v526
        %v538 = vmax.f32 %v519, %v536
        %539 = vst [vmem:[#allocation3] sm:$0x3] %v538
        %p540 = scmp.eq.s32.totalorder %s21, 1
        // Predicated region
        $region57: #{video_classifier_forward.1} parent=39 // pred_check
          %p541 = pneg %p540
        $region58: #{video_classifier_forward.1} parent=39 // pred_check_branch
          %543 = sbr.rel (%p541) target = $region60
        $region59: #{video_classifier_forward.1} parent=39 // pred_region
          %v544 = vld [vmem:[#allocation2] sm:$0x3]
          %v545 = vmul.f32 %v544, 0.03125
          %v546 = vld [vmem:[#allocation3] sm:$0x3]
          %v547 = vpack.c.bf16 %v545, %v545
          %v548 = vpack.c.bf16 %v546, %v546
          %v549 = vld [vmem:[#allocation9] sm:$0xf]
          %v550 = vld [vmem:[#allocation9 + $0x4] sm:$0xf]
          %v551 = vld [vmem:[#allocation9 + $0x8] sm:$0xf]
          %v552 = vld [vmem:[#allocation9 + $0xc] sm:$0xf]
          %v553 = vld [vmem:[#allocation9 + $0x10] sm:$0xf]
          %v554 = vld [vmem:[#allocation9 + $0x14] sm:$0xf]
          %v555 = vld [vmem:[#allocation9 + $0x18] sm:$0xf]
          %v556 = vld [vmem:[#allocation9 + $0x1c] sm:$0xf]
          %v557 = vld [vmem:[#allocation9 + $0x20] sm:$0xf]
          %v558 = vld [vmem:[#allocation9 + $0x24] sm:$0xf]
          %v559 = vld [vmem:[#allocation9 + $0x28] sm:$0xf]
          %v560 = vld [vmem:[#allocation9 + $0x2c] sm:$0xf]
          %v561 = vld [vmem:[#allocation9 + $0x30] sm:$0xf]
          %v562 = vld [vmem:[#allocation9 + $0x34] sm:$0xf]
          %v563 = vld [vmem:[#allocation9 + $0x38] sm:$0xf]
          %v564 = vld [vmem:[#allocation9 + $0x3c] sm:$0xf]
          %v565 = vld [vmem:[#allocation9 + $0x40] sm:$0xf]
          %v566 = vld [vmem:[#allocation9 + $0x44] sm:$0xf]
          %v567 = vld [vmem:[#allocation9 + $0x48] sm:$0xf]
          %v568 = vld [vmem:[#allocation9 + $0x4c] sm:$0xf]
          %v569 = vld [vmem:[#allocation9 + $0x50] sm:$0xf]
          %v570 = vld [vmem:[#allocation9 + $0x54] sm:$0xf]
          %v571 = vld [vmem:[#allocation9 + $0x58] sm:$0xf]
          %v572 = vld [vmem:[#allocation9 + $0x5c] sm:$0xf]
          %v573 = vld [vmem:[#allocation9 + $0x60] sm:$0xf]
          %v574 = vld [vmem:[#allocation9 + $0x64] sm:$0xf]
          %v575 = vld [vmem:[#allocation9 + $0x68] sm:$0xf]
          %v576 = vld [vmem:[#allocation9 + $0x6c] sm:$0xf]
          %v577 = vld [vmem:[#allocation9 + $0x70] sm:$0xf]
          %v578 = vld [vmem:[#allocation9 + $0x74] sm:$0xf]
          %v579 = vld [vmem:[#allocation9 + $0x78] sm:$0xf]
          %v580 = vld [vmem:[#allocation9 + $0x7c] sm:$0xf]
          %v581 = vld [vmem:[%s4] sm:$0x1]
          %v583 = vperm.slane %v581, 0
          %v617 = vunpack.c.l.b16 %v549
          %v618 = vunpack.c.l.b16 %v550
          %v619 = vunpack.c.l.b16 %v551
          %v620 = vunpack.c.l.b16 %v552
          %v621 = vunpack.c.l.b16 %v553
          %v622 = vunpack.c.l.b16 %v554
          %v623 = vunpack.c.l.b16 %v555
          %v624 = vunpack.c.l.b16 %v556
          %v625 = vunpack.c.l.b16 %v557
          %v626 = vunpack.c.l.b16 %v558
          %v627 = vunpack.c.l.b16 %v559
          %v628 = vunpack.c.l.b16 %v560
          %v629 = vunpack.c.l.b16 %v561
          %v630 = vunpack.c.l.b16 %v562
          %v631 = vunpack.c.l.b16 %v563
          %v632 = vunpack.c.l.b16 %v564
          %v633 = vunpack.c.l.b16 %v565
          %v634 = vunpack.c.l.b16 %v566
          %v635 = vunpack.c.l.b16 %v567
          %v636 = vunpack.c.l.b16 %v568
          %v637 = vunpack.c.l.b16 %v569
          %v638 = vunpack.c.l.b16 %v570
          %v639 = vunpack.c.l.b16 %v571
          %v640 = vunpack.c.l.b16 %v572
          %v641 = vunpack.c.l.b16 %v573
          %v642 = vunpack.c.l.b16 %v574
          %v643 = vunpack.c.l.b16 %v575
          %v644 = vunpack.c.l.b16 %v576
          %v645 = vunpack.c.l.b16 %v577
          %v646 = vunpack.c.l.b16 %v578
          %v647 = vunpack.c.l.b16 %v579
          %v648 = vunpack.c.l.b16 %v580
          %v649 = vpack.c.b16 %v618, %v617
          %v650 = vpack.c.b16 %v620, %v619
          %v651 = vpack.c.b16 %v622, %v621
          %v652 = vpack.c.b16 %v624, %v623
          %v653 = vpack.c.b16 %v626, %v625
          %v654 = vpack.c.b16 %v628, %v627
          %v655 = vpack.c.b16 %v630, %v629
          %v656 = vpack.c.b16 %v632, %v631
          %v657 = vpack.c.b16 %v634, %v633
          %v658 = vpack.c.b16 %v636, %v635
          %v659 = vpack.c.b16 %v638, %v637
          %v660 = vpack.c.b16 %v640, %v639
          %v661 = vpack.c.b16 %v642, %v641
          %v662 = vpack.c.b16 %v644, %v643
          %v663 = vpack.c.b16 %v646, %v645
          %v664 = vpack.c.b16 %v648, %v647
          %681 = vmatpush.bf16.msra.mxu0 %v656
          %682 = vmatpush.bf16.msra.mxu0 %v655
          %683 = vmatpush.bf16.msra.mxu0 %v654
          %684 = vmatpush.bf16.msra.mxu0 %v653
          %685 = vmatpush.bf16.msra.mxu0 %v652
          %686 = vmatpush.bf16.msra.mxu0 %v651
          %687 = vmatpush.bf16.msra.mxu0 %v650
          %688 = vmatpush.bf16.msra.mxu0 %v649
          %689 = vmatmul.bf16.gmra.mxu0 %v547
          %v690 = vpop.f32.mrf.mxu0
          %v691 = vadd.f32 %v583, %v690
          %v692 = vpop.f32.mrf.mxu0
          %693 = vdwg.mxu0
          %694 = vmatpush.bf16.msra.mxu0 %v664
          %695 = vmatpush.bf16.msra.mxu0 %v663
          %696 = vmatpush.bf16.msra.mxu0 %v662
          %697 = vmatpush.bf16.msra.mxu0 %v661
          %698 = vmatpush.bf16.msra.mxu0 %v660
          %699 = vmatpush.bf16.msra.mxu0 %v659
          %700 = vmatpush.bf16.msra.mxu0 %v658
          %701 = vmatpush.bf16.msra.mxu0 %v657
          %702 = vmatmul.bf16.gmra.mxu0 %v548
          %v703 = vpop.f32.mrf.mxu0
          %v704 = vadd.f32 %v691, %v703
          %v705 = vpop.f32.mrf.mxu0
          %706 = vdwg.mxu0
          %707 = vst [vmem:[#allocation10] sm:$0x3] %v704
        $region60: #{video_classifier_forward.1} parent=39 // pred_fallthru
          _
        // Predicated region
        $region61: #{video_classifier_forward.1} parent=39 // pred_check
          %p708 = pneg %p144
        $region62: #{video_classifier_forward.1} parent=39 // pred_check_branch
          %710 = sbr.rel (%p708) target = $region64
        $region63: #{video_classifier_forward.1} parent=39 // pred_region
          %712 = vsyncadd [#allocation6], 0
          %s714 = sshll.u32 [#allocation10], 4
          %s715 = int_to_ptr.vmem [resolvable:$true] %s714
          %s716 = sshll.u32 %s5, 4
          %s717 = int_to_ptr.hbm [resolvable:$true] %s716
          %719 = dma.vmem_to_hbm [thread:$0]  %s715, 32, %s717, [#allocation6]
        $region64: #{video_classifier_forward.1} parent=39 // pred_fallthru
          _
        // Predicated region
        $region65: #{video_classifier_forward.1} parent=39 // pred_check
          %p720 = pneg %p144
        $region66: #{video_classifier_forward.1} parent=39 // pred_check_branch
          %722 = sbr.rel (%p720) target = $region68
        $region67: #{video_classifier_forward.1} parent=39 // pred_region
          %724 = dma.done [#allocation6], 32
        $region68: #{video_classifier_forward.1} parent=39 // pred_fallthru
          _
      $region40: #{video_classifier_forward.1} parent=5 // pred_fallthru
        _
      %p725 = scmp.le.s32.totalorder 2, %s16
      // Predicated region
      $region69: #{video_classifier_forward.1} parent=5 // pred_check
        %p726 = pneg %p725
      $region70: #{video_classifier_forward.1} parent=5 // pred_check_branch
        %728 = sbr.rel (%p726) target = $region72
      $region71: #{video_classifier_forward.1} parent=5 // pred_region
        %s729 = ssub.s32 %s16, 2
      $region72: #{video_classifier_forward.1} parent=5 // pred_fallthru
        _
    $region6: #{video_classifier_forward.1} parent=1 // loop_footer
      %s20 = sadd.s32 1, %s16
    $region7: #{video_classifier_forward.1} parent=1 // loop_footer_branch
      %15 = sbr.rel target = $region3
    $region8: #{video_classifier_forward.1} parent=1 // loop_exit
      _
    %730 = vsyncpa [#allocation5], 1
    %s731 = scalar_lea.sflag [#allocation5], 1
    %732 = vsyncpa %s731, 1
    %733 = vsyncpa [#allocation8], 1
    %734 = vsyncpa [#allocation6], 1
    %s735 = scalar_lea.sflag [#allocation6], 1
    %736 = vsyncpa %s735, 1

</llo_original>
